<compile_context>
chip_gen: v6e
topology: v6e:2x2x1
jax: 0.10.0
libtpu: 0.0.40
codegen_flags: <defaults>
</compile_context>

<pallas_src>
import jax
import jax.numpy as jnp
from jax.experimental import pallas as pl
from jax.experimental.pallas import tpu as pltpu


def _cdiv(a, b):
    return -(-a // b)


def _sinu_kernel(col_ref, freq_ref, sub_ref, sin_w_ref, cos_w_ref, out_ref):
    # col_ref:   (block_rows, 1) f32  -> pack * global_slab_row for this block
    # freq_ref:  (1, width) f32       -> [inv_freq, inv_freq, 0-pad] tiled `pack` times
    # sub_ref:   (1, width) f32       -> packed-position offset (lane // pad_dim)
    # sin_w_ref: (1, width) f32       -> scale on sin lanes, 0 elsewhere
    # cos_w_ref: (1, width) f32       -> scale on cos lanes, 0 elsewhere
    # out_ref:   (block_rows, width) f32 packed slab block
    t = col_ref[...] + sub_ref[...]        # exact integer positions (n < 2^24)
    a = t * freq_ref[...]                  # same single f32 rounding as reference
    out_ref[...] = jnp.sin(a) * sin_w_ref[...] + jnp.cos(a) * cos_w_ref[...]


def scaled_sinu_embedding(n, scale, inv_freq, *, tile_rows=4096):
    """n: static sequence length; scale: (1,) f32; inv_freq: (dim//2,) f32 -> (n, dim) f32."""
    half = int(inv_freq.shape[0])
    dim = 2 * half
    tile_rows = max(8, (tile_rows // 8) * 8)

    # Lane-dense packing: pad dim up to pad_dim (a divisor or multiple of 128)
    # so the slab lane width is a multiple of 128 -> full-width stores.
    if dim <= 128:
        pad_dim = 1 << (dim - 1).bit_length()       # next power of two, divides 128
        pack = 128 // pad_dim
    else:
        pad_dim = _cdiv(dim, 128) * 128
        pack = 1
    width = pack * pad_dim                          # multiple of 128

    inv_freq = inv_freq.astype(jnp.float32)
    scale_f = scale.reshape(()).astype(jnp.float32)

    zeros_g = jnp.zeros((pad_dim,), jnp.float32)
    freq_grp = zeros_g.at[:half].set(inv_freq).at[half:dim].set(inv_freq)
    sin_grp = zeros_g.at[:half].set(1.0)
    cos_grp = zeros_g.at[half:dim].set(1.0)

    freq_row = jnp.tile(freq_grp, pack).reshape(1, width)
    sin_w_row = (jnp.tile(sin_grp, pack) * scale_f).reshape(1, width)   # scale folded in
    cos_w_row = (jnp.tile(cos_grp, pack) * scale_f).reshape(1, width)
    sub_row = jnp.repeat(jnp.arange(pack, dtype=jnp.float32),
                         pad_dim).reshape(1, width)

    # Grid sizing: >=2 blocks when possible (v7x megacore), rows multiple of 8.
    slab_rows = _cdiv(n, pack)
    grid_rows = max(2, _cdiv(slab_rows, tile_rows))
    block_rows = _cdiv(_cdiv(slab_rows, grid_rows), 8) * 8
    grid_rows = _cdiv(slab_rows, block_rows)
    slab_rows_padded = grid_rows * block_rows

    col = (jnp.arange(slab_rows_padded, dtype=jnp.float32)
           * float(pack)).reshape(slab_rows_padded, 1)

    total = slab_rows_padded * width
    slab = pl.pallas_call(
        _sinu_kernel,
        out_shape=jax.ShapeDtypeStruct((slab_rows_padded, width), jnp.float32),
        grid=(grid_rows,),
        in_specs=[
            pl.BlockSpec((block_rows, 1), lambda i: (i, 0)),        # row-base column
            pl.BlockSpec(memory_space=pltpu.MemorySpace.VMEM),      # freq row (resident)
            pl.BlockSpec(memory_space=pltpu.MemorySpace.VMEM),      # sub row (resident)
            pl.BlockSpec(memory_space=pltpu.MemorySpace.VMEM),      # sin weights
            pl.BlockSpec(memory_space=pltpu.MemorySpace.VMEM),      # cos weights
        ],
        out_specs=pl.BlockSpec((block_rows, width), lambda i: (i, 0)),
        compiler_params=pltpu.CompilerParams(
            dimension_semantics=("parallel",)),
        cost_estimate=pl.CostEstimate(
            flops=6 * total,
            transcendentals=2 * total,
            bytes_accessed=4 * total + 4 * slab_rows_padded),
    )(col, freq_row, sub_row, sin_w_row, cos_w_row)

    # Free row-major reshape back to (positions, pad_dim); drop padding.
    emb = slab.reshape(slab_rows_padded * pack, pad_dim)
    if pad_dim != dim:
        emb = emb[:, :dim]
    return emb[:n]


def _reference(n, scale, inv_freq):
    t = jnp.arange(n, dtype=jnp.float32)
    sinu = jnp.einsum("i,j->ij", t, inv_freq.astype(jnp.float32))
    emb = jnp.concatenate([jnp.sin(sinu), jnp.cos(sinu)], axis=-1)
    return emb * scale


if __name__ == "__main__":
    # Module parameters (deterministic init, per __init__):
    dim = 32
    scale = jnp.ones((1,), dtype=jnp.float32)                       # nn.Parameter(torch.ones(1))
    inv_freq = 1.0 / (10000.0 ** (jnp.arange(0, dim, 2, dtype=jnp.float32) / dim))

    # Example input: (batch=2, seq=8, dim=32); only the sequence length is used.
    key = jax.random.PRNGKey(0)
    x = jax.random.normal(key, (2, 8, dim), dtype=jnp.float32)

    out = scaled_sinu_embedding(x.shape[1], scale, inv_freq)
    out = jax.block_until_ready(out)
    assert out.shape == (x.shape[1], dim), out.shape
    ref = _reference(x.shape[1], scale, inv_freq)
    assert jnp.allclose(out, ref, atol=1e-5, rtol=1e-5), "mismatch vs reference (n=8)"

    # Long-sequence check: catches argument/phase precision drift (the old
    # sin(x + pi/2) cos trick failed at this scale).  Remaining slack only
    # covers possible f32 sin/cos range-reduction differences at |arg| ~ n.
    n_big = 4096
    out_big = jax.block_until_ready(scaled_sinu_embedding(n_big, scale, inv_freq))
    ref_big = _reference(n_big, scale, inv_freq)
    assert out_big.shape == (n_big, dim), out_big.shape
    assert jnp.allclose(out_big, ref_big, atol=1e-3, rtol=1e-3), "mismatch vs reference (n=4096)"

    print("KERNEL_OK")
</pallas_src>

<mosaic_0001>
module attributes {stable_mosaic.version = 11 : i64} {
  func.func @_sinu_kernel(%arg0: i32, %arg1: memref<8x1xf32, #tpu.memory_space<vmem>>, %arg2: memref<1x128xf32, #tpu.memory_space<vmem>>, %arg3: memref<1x128xf32, #tpu.memory_space<vmem>>, %arg4: memref<1x128xf32, #tpu.memory_space<vmem>>, %arg5: memref<1x128xf32, #tpu.memory_space<vmem>>, %arg6: memref<8x128xf32, #tpu.memory_space<vmem>>) attributes {dimension_semantics = [#tpu.dimension_semantics<parallel>], iteration_bounds = array<i64: 1>, scalar_prefetch = 0 : i64, scratch_operands = 0 : i64, tpu.core_type = #tpu.core_type<tc>, window_params = [{transform_indices = @transform_0, window_bounds = array<i64: 8, 1>}, {pipeline_mode = #tpu.pipeline_mode<synchronous>, transform_indices = @transform_1, window_bounds = array<i64: 1, 128>}, {pipeline_mode = #tpu.pipeline_mode<synchronous>, transform_indices = @transform_2, window_bounds = array<i64: 1, 128>}, {pipeline_mode = #tpu.pipeline_mode<synchronous>, transform_indices = @transform_3, window_bounds = array<i64: 1, 128>}, {pipeline_mode = #tpu.pipeline_mode<synchronous>, transform_indices = @transform_4, window_bounds = array<i64: 1, 128>}, {transform_indices = @transform_5, window_bounds = array<i64: 8, 128>}]} {
    %c0 = arith.constant 0 : index
    %c0_0 = arith.constant 0 : index
    %0 = vector.load %arg1[%c0, %c0_0] : memref<8x1xf32, #tpu.memory_space<vmem>>, vector<8x1xf32>
    %c0_1 = arith.constant 0 : index
    %c0_2 = arith.constant 0 : index
    %1 = vector.load %arg3[%c0_1, %c0_2] : memref<1x128xf32, #tpu.memory_space<vmem>>, vector<1x128xf32>
    %2 = vector.broadcast %0 : vector<8x1xf32> to vector<8x128xf32>
    %3 = vector.broadcast %1 : vector<1x128xf32> to vector<8x128xf32>
    %4 = arith.addf %2, %3 : vector<8x128xf32>
    %c0_3 = arith.constant 0 : index
    %c0_4 = arith.constant 0 : index
    %5 = vector.load %arg2[%c0_3, %c0_4] : memref<1x128xf32, #tpu.memory_space<vmem>>, vector<1x128xf32>
    %6 = vector.broadcast %5 : vector<1x128xf32> to vector<8x128xf32>
    %7 = arith.mulf %4, %6 : vector<8x128xf32>
    %8 = math.sin %7 : vector<8x128xf32>
    %c0_5 = arith.constant 0 : index
    %c0_6 = arith.constant 0 : index
    %9 = vector.load %arg4[%c0_5, %c0_6] : memref<1x128xf32, #tpu.memory_space<vmem>>, vector<1x128xf32>
    %10 = vector.broadcast %9 : vector<1x128xf32> to vector<8x128xf32>
    %11 = arith.mulf %8, %10 : vector<8x128xf32>
    %12 = math.cos %7 : vector<8x128xf32>
    %c0_7 = arith.constant 0 : index
    %c0_8 = arith.constant 0 : index
    %13 = vector.load %arg5[%c0_7, %c0_8] : memref<1x128xf32, #tpu.memory_space<vmem>>, vector<1x128xf32>
    %14 = vector.broadcast %13 : vector<1x128xf32> to vector<8x128xf32>
    %15 = arith.mulf %12, %14 : vector<8x128xf32>
    %16 = arith.addf %11, %15 : vector<8x128xf32>
    %c0_9 = arith.constant 0 : index
    %c0_10 = arith.constant 0 : index
    %17 = vector.load %arg6[%c0_9, %c0_10] : memref<8x128xf32, #tpu.memory_space<vmem>>, vector<8x128xf32>
    tpu.vector_store %arg6[%c0_9, %c0_10], %16 {strides = array<i32>} : memref<8x128xf32, #tpu.memory_space<vmem>>, vector<8x128xf32>,
    return
  }
  func.func @transform_0(%arg0: i32) -> (i32, i32) {
    %c0_i32 = arith.constant 0 : i32
    %c0_i32_0 = arith.constant 0 : i32
    return %arg0, %c0_i32 : i32, i32
  }
  func.func @transform_1(%arg0: i32) -> (i32, i32) {
    %c0_i32 = arith.constant 0 : i32
    %c0_i32_0 = arith.constant 0 : i32
    %c0_i32_1 = arith.constant 0 : i32
    return %c0_i32, %c0_i32_0 : i32, i32
  }
  func.func @transform_2(%arg0: i32) -> (i32, i32) {
    %c0_i32 = arith.constant 0 : i32
    %c0_i32_0 = arith.constant 0 : i32
    %c0_i32_1 = arith.constant 0 : i32
    return %c0_i32, %c0_i32_0 : i32, i32
  }
  func.func @transform_3(%arg0: i32) -> (i32, i32) {
    %c0_i32 = arith.constant 0 : i32
    %c0_i32_0 = arith.constant 0 : i32
    %c0_i32_1 = arith.constant 0 : i32
    return %c0_i32, %c0_i32_0 : i32, i32
  }
  func.func @transform_4(%arg0: i32) -> (i32, i32) {
    %c0_i32 = arith.constant 0 : i32
    %c0_i32_0 = arith.constant 0 : i32
    %c0_i32_1 = arith.constant 0 : i32
    return %c0_i32, %c0_i32_0 : i32, i32
  }
  func.func @transform_5(%arg0: i32) -> (i32, i32) {
    %c0_i32 = arith.constant 0 : i32
    %c0_i32_0 = arith.constant 0 : i32
    return %arg0, %c0_i32 : i32, i32
  }
}

</mosaic_0001>

<llo_original>
// kernel: tpu_custom_call.1
$region0: #{tpu_custom_call.1}
  #allocation0 [shape = 'u32[]', space=smem, size = 0x4, offset = 0x4, fixed_abs, tag = 'smem constant byte address 0x4 - core index']
  #allocation1 [shape = 'u32[144,128]{1,0:T(1,128)}', space=vmem, size = 0x12000, scoped, tag = 'internal scratch']
  %s0 = inlined_call_operand.vmem [shape: f32[8,1], index: 0, kind: input, shape index: {}]
  %s1 = inlined_call_operand.vmem [shape: f32[1,128], index: 1, kind: input, shape index: {}]
  %s2 = inlined_call_operand.vmem [shape: f32[1,128], index: 2, kind: input, shape index: {}]
  %s3 = inlined_call_operand.vmem [shape: f32[1,128], index: 3, kind: input, shape index: {}]
  %s4 = inlined_call_operand.vmem [shape: f32[1,128], index: 4, kind: input, shape index: {}]
  %s5 = inlined_call_operand.hbm [shape: f32[8,128], index: 5, kind: output, shape index: {}]
  %s6 = sld [smem:[#allocation0]]
  $region30: #{tpu_custom_call.1} parent=0
    _
  %s8 = ssub.s32 1, %s6
  %s9 = scalar_select 0, %s8, %s6
  $region1: #{tpu_custom_call.1} parent=0
    #allocation2 [shape = 'u8[4096]{0}', space=vmem, size = 0x1000, scoped, tag = 'output window, operand 0, single buffered']
    #allocation3 [shape = 's32[1]{0}', space=sflag, size = 0x4, scoped, tag = 'scoped memory for tpu_custom_call.1']
    %10 = vsyncpa [#allocation3], 0
    // Predicated region
    $region2: #{tpu_custom_call.1} parent=1 // pred_check
      _
    $region3: #{tpu_custom_call.1} parent=1 // pred_check_branch
      %12 = sbr.rel (0) target = $region5
    $region4: #{tpu_custom_call.1} parent=1 // pred_region
      _
    $region5: #{tpu_custom_call.1} parent=1 // pred_fallthru
      _
    // Predicated region
    $region6: #{tpu_custom_call.1} parent=1 // pred_check
      _
    $region7: #{tpu_custom_call.1} parent=1 // pred_check_branch
      %14 = sbr.rel (0) target = $region9
    $region8: #{tpu_custom_call.1} parent=1 // pred_region
      _
    $region9: #{tpu_custom_call.1} parent=1 // pred_fallthru
      _
    // Predicated region
    $region10: #{tpu_custom_call.1} parent=1 // pred_check
      _
    $region11: #{tpu_custom_call.1} parent=1 // pred_check_branch
      %16 = sbr.rel (0) target = $region13
    $region12: #{tpu_custom_call.1} parent=1 // pred_region
      _
    $region13: #{tpu_custom_call.1} parent=1 // pred_fallthru
      _
    // Predicated region
    $region14: #{tpu_custom_call.1} parent=1 // pred_check
      _
    $region15: #{tpu_custom_call.1} parent=1 // pred_check_branch
      %18 = sbr.rel (0) target = $region17
    $region16: #{tpu_custom_call.1} parent=1 // pred_region
      _
    $region17: #{tpu_custom_call.1} parent=1 // pred_fallthru
      _
    // Predicated region
    $region18: #{tpu_custom_call.1} parent=1 // pred_check
      _
    $region19: #{tpu_custom_call.1} parent=1 // pred_check_branch
      %20 = sbr.rel (0) target = $region21
    $region20: #{tpu_custom_call.1} parent=1 // pred_region
      _
    $region21: #{tpu_custom_call.1} parent=1 // pred_fallthru
      _
    %v21 = vld [vmem:[%s0] sm:$0xff]
    %v22 = vld [vmem:[%s2] sm:$0x1]
    %24 = vset.pattern.permute.xlu0 0
    %25 = vperm.xlu0 %24, %v21
    %v26 = vpop.permute.xlu0 %25
    %v29 = vlaneseq
    %v30 = vshrl.u32 %v29, 7
    %v31 = vsub.s32 0, %v30
    %v32 = vrot.slane %v22, %v31
    %v34 = vadd.f32 %v26, %v32
    %v35 = vld [vmem:[%s1] sm:$0x1]
    %v37 = vlaneseq
    %v38 = vshrl.u32 %v37, 7
    %v39 = vsub.s32 0, %v38
    %v40 = vrot.slane %v35, %v39
    %v42 = vmul.f32 %v34, %v40
    %v43 = vand.u32 2147483647, %v42
    %vm44 = vcmp.le.f32.partialorder %v43, 0.7853982
    %vm45 = vcmp.lt.s32.totalorder %v42, 0
    %v46 = vand.u32 %v42, 2139095040
    %v47 = vshrl.u32 %v46, 23
    %v48 = vsub.s32 %v47, 127
    %v49 = vand.u32 2147483647, %v42
    %v50 = vand.u32 %v49, 8388607
    %v51 = vor.u32 %v50, 8388608
    %v52 = vsub.s32 0, %v51
    %v53 = vadd.s32 %v48, 1
    %vm54 = vcmp.gt.s32.totalorder %v53, 0
    %v55 = vsel %vm54, %v53, 0
    %v56 = vshrl.u32 %v55, 5
    %v57 = vand.u32 %v55, 31
    %v58 = vsub.s32 32, %v57
    %v59 = vshrl.u32 683565275, %v58
    %v60 = vshll.u32 683565275, %v57
    %v61 = vshrl.u32 2475754826, %v58
    %v62 = vor.u32 %v60, %v61
    %v63 = vshll.u32 2475754826, %v57
    %v64 = vshrl.u32 2131351028, %v58
    %v65 = vor.u32 %v63, %v64
    %v66 = vshll.u32 2131351028, %v57
    %v67 = vshrl.u32 2102212464, %v58
    %v68 = vor.u32 %v66, %v67
    %v69 = vshll.u32 2102212464, %v57
    %v70 = vshrl.u32 920167782, %v58
    %v71 = vor.u32 %v69, %v70
    %v72 = vshll.u32 920167782, %v57
    %v73 = vshrl.u32 1326507024, %v58
    %v74 = vor.u32 %v72, %v73
    %vm75 = vcmp.lt.s32.totalorder %v56, 1
    %vm76 = vcmp.lt.s32.totalorder %v56, 2
    %vm77 = vcmp.lt.s32.totalorder %v56, 3
    %vm78 = vcmp.lt.s32.totalorder %v56, 4
    %v79 = vsel %vm75, %v59, %v62
    %v80 = vsel %vm78, %v68, 2102212464
    %v81 = vsel %vm77, %v65, %v80
    %v82 = vsel %vm76, %v79, %v81
    %v83 = vsel %vm75, %v62, %v65
    %v84 = vsel %vm78, %v71, 920167782
    %v85 = vsel %vm77, %v68, %v84
    %v86 = vsel %vm76, %v83, %v85
    %v87 = vsel %vm75, %v65, %v68
    %v88 = vsel %vm78, %v74, 1326507024
    %v89 = vsel %vm77, %v71, %v88
    %v90 = vsel %vm76, %v87, %v89
    %v91 = vshll.u32 %v51, 8
    %v92 = vmul.u32.u64.compose %v91, %v90
    %v93 = vextract.low.u32 %v92
    %v94 = vextract.high.u32 %v92
    %v95 = vmul.u32.u64.compose %v91, %v86
    %v96 = vextract.low.u32 %v95
    %v97 = vextract.high.u32 %v95
    %v98 = vmul.u32 %v91, %v82
    %v99 = vadd.s32 %v94, %v96
    %vm100 = vc.u32 %v94, %v96
    %v101 = vadd.s32 %v97, 1
    %v102 = vsel %vm100, %v101, %v97
    %v103 = vadd.s32 %v98, %v102
    %v104 = vadd.s32 %v103, 536870912
    %v105 = vshrl.u32 %v104, 30
    %v106 = vshll.u32 %v105, 30
    %v107 = vsub.s32 %v103, %v106
    %vm108 = vcmp.lt.s32.totalorder %v107, 0
    %v109 = vsub.s32 0, %v107
    %v110 = vsel %vm108, %v109, %v107
    %v111 = vclz %v110
    %v112 = vsub.s32 %v111, 2
    %vm113 = vcmp.gt.s32.totalorder 0, %v112
    %v114 = vsel %vm113, 0, %v112
    %v115 = vsub.s32 32, %v114
    %v116 = vshll.u32 %v107, %v114
    %v117 = vshrl.u32 %v99, %v115
    %v118 = vor.u32 %v116, %v117
    %v119 = vsub.s32 4294967266, %v114
    %v120 = vadd.s32 %v119, 127
    %v121 = vshll.u32 %v120, 23
    %v122 = vor.u32 4788187, %v121
    %v123 = vand.u32 2147483647, %v122
    %v125 = vcvt.s32.f32 %v118
    %v126 = vmul.f32 %v125, %v123
    %v127 = vxor.u32 %v126, 2147483648
    %v128 = vsel %vm45, %v127, %v126
    %v129 = vsub.s32 4, %v105
    %v130 = vsel %vm45, %v129, %v105
    %v131 = vsel %vm44, %v42, %v128
    %v132 = vsel %vm44, 0, %v130
    %v133 = vcosq.f32.pop %v131
    %v134 = vsinq.f32.pop %v131
    %vm135 = vweird.f32 %v42
    %v136 = vadd.s32 %v132, 3
    %v137 = vand.u32 %v136, 3
    %vm138 = vcmp.lt.s32.totalorder %v137, 2
    %vm139 = vcmp.eq.s32.totalorder %v137, 0
    %v140 = vxor.u32 %v134, 2147483648
    %v141 = vsel %vm139, %v133, %v140
    %vm142 = vcmp.eq.s32.totalorder %v137, 2
    %v143 = vxor.u32 %v133, 2147483648
    %v144 = vsel %vm142, %v143, %v134
    %v145 = vsel %vm138, %v141, %v144
    %v146 = vsel %vm135, nan, %v145
    %v147 = vld [vmem:[%s3] sm:$0x1]
    %v149 = vlaneseq
    %v150 = vshrl.u32 %v149, 7
    %v151 = vsub.s32 0, %v150
    %v152 = vrot.slane %v147, %v151
    %v154 = vmul.f32 %v146, %v152
    %v155 = vand.u32 2147483647, %v42
    %vm156 = vcmp.le.f32.partialorder %v155, 0.7853982
    %vm157 = vcmp.lt.s32.totalorder %v42, 0
    %v158 = vand.u32 %v42, 2139095040
    %v159 = vshrl.u32 %v158, 23
    %v160 = vsub.s32 %v159, 127
    %v161 = vand.u32 2147483647, %v42
    %v162 = vand.u32 %v161, 8388607
    %v163 = vor.u32 %v162, 8388608
    %v164 = vsub.s32 0, %v163
    %v165 = vadd.s32 %v160, 1
    %vm166 = vcmp.gt.s32.totalorder %v165, 0
    %v167 = vsel %vm166, %v165, 0
    %v168 = vshrl.u32 %v167, 5
    %v169 = vand.u32 %v167, 31
    %v170 = vsub.s32 32, %v169
    %v171 = vshrl.u32 683565275, %v170
    %v172 = vshll.u32 683565275, %v169
    %v173 = vshrl.u32 2475754826, %v170
    %v174 = vor.u32 %v172, %v173
    %v175 = vshll.u32 2475754826, %v169
    %v176 = vshrl.u32 2131351028, %v170
    %v177 = vor.u32 %v175, %v176
    %v178 = vshll.u32 2131351028, %v169
    %v179 = vshrl.u32 2102212464, %v170
    %v180 = vor.u32 %v178, %v179
    %v181 = vshll.u32 2102212464, %v169
    %v182 = vshrl.u32 920167782, %v170
    %v183 = vor.u32 %v181, %v182
    %v184 = vshll.u32 920167782, %v169
    %v185 = vshrl.u32 1326507024, %v170
    %v186 = vor.u32 %v184, %v185
    %vm187 = vcmp.lt.s32.totalorder %v168, 1
    %vm188 = vcmp.lt.s32.totalorder %v168, 2
    %vm189 = vcmp.lt.s32.totalorder %v168, 3
    %vm190 = vcmp.lt.s32.totalorder %v168, 4
    %v191 = vsel %vm187, %v171, %v174
    %v192 = vsel %vm190, %v180, 2102212464
    %v193 = vsel %vm189, %v177, %v192
    %v194 = vsel %vm188, %v191, %v193
    %v195 = vsel %vm187, %v174, %v177
    %v196 = vsel %vm190, %v183, 920167782
    %v197 = vsel %vm189, %v180, %v196
    %v198 = vsel %vm188, %v195, %v197
    %v199 = vsel %vm187, %v177, %v180
    %v200 = vsel %vm190, %v186, 1326507024
    %v201 = vsel %vm189, %v183, %v200
    %v202 = vsel %vm188, %v199, %v201
    %v203 = vshll.u32 %v163, 8
    %v204 = vmul.u32.u64.compose %v203, %v202
    %v205 = vextract.low.u32 %v204
    %v206 = vextract.high.u32 %v204
    %v207 = vmul.u32.u64.compose %v203, %v198
    %v208 = vextract.low.u32 %v207
    %v209 = vextract.high.u32 %v207
    %v210 = vmul.u32 %v203, %v194
    %v211 = vadd.s32 %v206, %v208
    %vm212 = vc.u32 %v206, %v208
    %v213 = vadd.s32 %v209, 1
    %v214 = vsel %vm212, %v213, %v209
    %v215 = vadd.s32 %v210, %v214
    %v216 = vadd.s32 %v215, 536870912
    %v217 = vshrl.u32 %v216, 30
    %v218 = vshll.u32 %v217, 30
    %v219 = vsub.s32 %v215, %v218
    %vm220 = vcmp.lt.s32.totalorder %v219, 0
    %v221 = vsub.s32 0, %v219
    %v222 = vsel %vm220, %v221, %v219
    %v223 = vclz %v222
    %v224 = vsub.s32 %v223, 2
    %vm225 = vcmp.gt.s32.totalorder 0, %v224
    %v226 = vsel %vm225, 0, %v224
    %v227 = vsub.s32 32, %v226
    %v228 = vshll.u32 %v219, %v226
    %v229 = vshrl.u32 %v211, %v227
    %v230 = vor.u32 %v228, %v229
    %v231 = vsub.s32 4294967266, %v226
    %v232 = vadd.s32 %v231, 127
    %v233 = vshll.u32 %v232, 23
    %v234 = vor.u32 4788187, %v233
    %v235 = vand.u32 2147483647, %v234
    %v237 = vcvt.s32.f32 %v230
    %v238 = vmul.f32 %v237, %v235
    %v239 = vxor.u32 %v238, 2147483648
    %v240 = vsel %vm157, %v239, %v238
    %v241 = vsub.s32 4, %v217
    %v242 = vsel %vm157, %v241, %v217
    %v243 = vsel %vm156, %v42, %v240
    %v244 = vsel %vm156, 0, %v242
    %v245 = vcosq.f32.pop %v243
    %v246 = vsinq.f32.pop %v243
    %vm247 = vweird.f32 %v42
    %v248 = vand.u32 %v244, 3
    %vm249 = vcmp.lt.s32.totalorder %v248, 2
    %vm250 = vcmp.eq.s32.totalorder %v248, 0
    %v251 = vxor.u32 %v246, 2147483648
    %v252 = vsel %vm250, %v245, %v251
    %vm253 = vcmp.eq.s32.totalorder %v248, 2
    %v254 = vxor.u32 %v245, 2147483648
    %v255 = vsel %vm253, %v254, %v246
    %v256 = vsel %vm249, %v252, %v255
    %v257 = vsel %vm247, nan, %v256
    %v258 = vld [vmem:[%s4] sm:$0x1]
    %v260 = vlaneseq
    %v261 = vshrl.u32 %v260, 7
    %v262 = vsub.s32 0, %v261
    %v263 = vrot.slane %v258, %v262
    %v265 = vmul.f32 %v257, %v263
    %v266 = vadd.f32 %v154, %v265
    %267 = vst [vmem:[#allocation2] sm:$0xff] %v266
    // Predicated region
    $region22: #{tpu_custom_call.1} parent=1 // pred_check
      _
    $region23: #{tpu_custom_call.1} parent=1 // pred_check_branch
      %269 = sbr.rel (0) target = $region25
    $region24: #{tpu_custom_call.1} parent=1 // pred_region
      %s271 = ssub.s32 128, 128
      %272 = vsyncadd [#allocation3], %s271
      %s274 = sshll.u32 [#allocation2], 4
      %s275 = int_to_ptr.vmem [resolvable:$true] %s274
      %277 = dma.vmem_to_hbm [thread:$0]  %s275, 128, %s5, [#allocation3]
    $region25: #{tpu_custom_call.1} parent=1 // pred_fallthru
      _
    // Predicated region
    $region26: #{tpu_custom_call.1} parent=1 // pred_check
      _
    $region27: #{tpu_custom_call.1} parent=1 // pred_check_branch
      %279 = sbr.rel (0) target = $region29
    $region28: #{tpu_custom_call.1} parent=1 // pred_region
      %280 = dma.done [#allocation3], 128
    $region29: #{tpu_custom_call.1} parent=1 // pred_fallthru
      _
    %281 = vsyncpa [#allocation3], 1

</llo_original>
